<compile_context>
chip_gen: v7x
topology: tpu7x:2x2x1
jax: 0.10.0
libtpu: 0.0.40
codegen_flags: <defaults>
</compile_context>

<pallas_src>
import functools

import jax
import jax.numpy as jnp
from jax.experimental import pallas as pl
from jax.experimental.pallas import tpu as pltpu

_EPS = 1e-5
_LANE = 128


def _round_up(n, m):
    return ((n + m - 1) // m) * m


# ---------------------------------------------------------------------------
# Fused kernel
# ---------------------------------------------------------------------------
def _bn_train(y):
    """BatchNorm1d train-mode forward, affine=False, biased variance.

    One-pass form: sum(y) and sum(y*y) are independent reductions, so the two
    XLU passes overlap instead of serializing through a VPU subtract/square.
    """
    inv_n = 1.0 / y.shape[0]
    s1 = jnp.sum(y, axis=0, keepdims=True)
    s2 = jnp.sum(y * y, axis=0, keepdims=True)
    mean = s1 * inv_n
    var = jnp.maximum(s2 * inv_n - mean * mean, 0.0)   # clamp fp cancellation
    return (y - mean) * jax.lax.rsqrt(var + _EPS)


def _make_fused_kernel(dims_p):
    """dims_p = (Din0_pad, D1_pad, ..., DL_pad), all multiples of 128 (static)."""
    n_layers = len(dims_p) - 1
    w_offs, off = [], 0
    for l in range(n_layers):
        w_offs.append(off)
        off += dims_p[l]            # row offset of layer l's wT block (tile-aligned)

    def kernel(x_ref, w_ref, b_ref, o_ref):
        h = x_ref[...]                                           # [N, Din0_p] f32
        for l in range(n_layers):
            din_p, dout_p = dims_p[l], dims_p[l + 1]
            # Static, tile-aligned views into the packed buffers (no copies).
            wt = w_ref[w_offs[l]:w_offs[l] + din_p, :dout_p]     # bf16 [din_p, dout_p]
            b = b_ref[l:l + 1, :dout_p]                          # f32  [1, dout_p]
            if l == n_layers - 1:
                # last layer: BatchNorm1d -> Linear
                h = _bn_train(h)
            z = jnp.dot(h.astype(jnp.bfloat16), wt,
                        preferred_element_type=jnp.float32) + b  # MXU bf16, f32 acc
            if l == n_layers - 1:
                h = z
            else:
                # hidden layer: Linear -> Sigmoid -> BatchNorm1d
                h = _bn_train(jax.nn.sigmoid(z))
        o_ref[...] = h                                           # lane-dense store

    return kernel


# ---------------------------------------------------------------------------
# Wrapper
# ---------------------------------------------------------------------------
@functools.partial(jax.jit, static_argnames=("dims_p", "d_out"))
def mlp_net_forward(x, w_packed, b_packed, dims_p, d_out):
    """x: [N, F] f32. w_packed: [sum(dims_p[:-1]), max(dims_p[1:])] bf16.
    b_packed: [L, max(dims_p[1:])] f32. Returns [N, d_out] f32."""
    n, f = x.shape
    n_layers = len(dims_p) - 1
    if f < dims_p[0]:
        x = jnp.pad(x, ((0, 0), (0, dims_p[0] - f)))             # lane-dense input

    # Advisory cost estimate (shapes static under jit).
    flops, transcendentals = 0, 0
    bytes_accessed = x.size * 4 + n * dims_p[-1] * 4 + w_packed.size * 2 + b_packed.size * 4
    for l in range(n_layers):
        flops += 2 * n * dims_p[l] * dims_p[l + 1]
        if l != n_layers - 1:
            transcendentals += n * dims_p[l + 1]                 # sigmoid on EUP

    vmem_spec = pl.BlockSpec(memory_space=pltpu.MemorySpace.VMEM)
    out_p = pl.pallas_call(
        _make_fused_kernel(dims_p),
        out_shape=jax.ShapeDtypeStruct((n, dims_p[-1]), jnp.float32),
        in_specs=[vmem_spec, vmem_spec, vmem_spec],
        out_specs=vmem_spec,
        cost_estimate=pl.CostEstimate(
            flops=flops,
            transcendentals=transcendentals,
            bytes_accessed=bytes_accessed),
    )(x, w_packed, b_packed)
    return out_p[:, :d_out]                                      # drop zero padding


# ---------------------------------------------------------------------------
# Parameter init (kernel-ready packed layout; no per-call transposes/reshapes)
# ---------------------------------------------------------------------------
def init_mlp_params(key, layer_sizes, input_size):
    """PyTorch-Linear-like uniform init.

    Returns (w_packed_bf16, b_packed_f32, dims_p, raw_params):
      w_packed: all wT blocks ([Din_pad, Dout_pad], zero-padded to 128 multiples)
                stacked row-wise into one contiguous bf16 buffer.
      b_packed: one f32 row per layer, zero-padded to the max padded width.
      raw_params: unpadded f32 (w, b) per layer, for the pure-JAX reference.
    """
    sizes = [input_size] + list(layer_sizes)
    dims_p = tuple(_round_up(s, _LANE) for s in sizes)
    n_layers = len(sizes) - 1
    w_cols = max(dims_p[1:])
    total_rows = sum(dims_p[:-1])

    w_packed = jnp.zeros((total_rows, w_cols), jnp.float32)
    b_packed = jnp.zeros((n_layers, w_cols), jnp.float32)
    raw_params = []
    off = 0
    for l in range(n_layers):
        fan_in, fan_out = sizes[l], sizes[l + 1]
        key, kw, kb = jax.random.split(key, 3)
        bound = 1.0 / (fan_in ** 0.5)
        w = jax.random.uniform(kw, (fan_out, fan_in), jnp.float32, -bound, bound)
        b = jax.random.uniform(kb, (fan_out,), jnp.float32, -bound, bound)
        raw_params.append((w, b))
        w_packed = w_packed.at[off:off + fan_in, :fan_out].set(w.T)
        b_packed = b_packed.at[l, :fan_out].set(b)
        off += dims_p[l]
    return w_packed.astype(jnp.bfloat16), b_packed, dims_p, raw_params


# ---------------------------------------------------------------------------
# Pure-JAX f32 reference (mirrors the PyTorch module exactly)
# ---------------------------------------------------------------------------
def mlp_net_reference(x, raw_params):
    h = x
    n_layers = len(raw_params)
    for l, (w, b) in enumerate(raw_params):
        if l == n_layers - 1:
            mean = h.mean(0, keepdims=True)
            var = ((h - mean) ** 2).mean(0, keepdims=True)       # biased variance
            h = (h - mean) / jnp.sqrt(var + _EPS)
            h = h @ w.T + b
        else:
            y = jax.nn.sigmoid(h @ w.T + b)
            mean = y.mean(0, keepdims=True)
            var = ((y - mean) ** 2).mean(0, keepdims=True)
            h = (y - mean) / jnp.sqrt(var + _EPS)
    return h


if __name__ == "__main__":
    key = jax.random.PRNGKey(0)
    k_x, k_p = jax.random.split(key)

    batch = 64                      # multiple of 8; use >=256 in production
    input_size = 32
    layer_sizes = [64, 32, 16]      # hidden sizes + final output size

    x = jax.random.normal(k_x, (batch, input_size), jnp.float32)
    w_packed, b_packed, dims_p, raw_params = init_mlp_params(k_p, layer_sizes, input_size)

    out = mlp_net_forward(x, w_packed, b_packed, dims_p, layer_sizes[-1])
    jax.block_until_ready(out)

    ref = mlp_net_reference(x, raw_params)

    assert out.shape == (batch, layer_sizes[-1])
    assert bool(jnp.all(jnp.isfinite(out)))
    # bf16 MXU operands + one-pass variance => small, expected drift vs pure f32.
    assert float(jnp.max(jnp.abs(out - ref))) < 0.1
    # TODO(synk): BatchNorm1d running_mean/running_var buffer updates are not
    # modeled (they do not affect the train-mode forward output).
    print("KERNEL_OK")
</pallas_src>

<mosaic_0001>
module attributes {stable_mosaic.version = 11 : i64} {
  func.func @kernel(%arg0: memref<64x128xf32, #tpu.memory_space<vmem>>, %arg1: memref<384x128xbf16, #tpu.memory_space<vmem>>, %arg2: memref<3x128xf32, #tpu.memory_space<vmem>>, %arg3: memref<64x128xf32, #tpu.memory_space<vmem>>) attributes {dimension_semantics = [], scalar_prefetch = 0 : i64, scratch_operands = 0 : i64, tpu.core_type = #tpu.core_type<tc>} {
    %c0 = arith.constant 0 : index
    %c0_0 = arith.constant 0 : index
    %0 = vector.load %arg0[%c0, %c0_0] : memref<64x128xf32, #tpu.memory_space<vmem>>, vector<64x128xf32>
    %c0_1 = arith.constant 0 : index
    %c0_2 = arith.constant 0 : index
    %1 = vector.load %arg1[%c0_1, %c0_2] : memref<384x128xbf16, #tpu.memory_space<vmem>>, vector<128x128xbf16>
    %c0_3 = arith.constant 0 : index
    %c0_4 = arith.constant 0 : index
    %2 = vector.load %arg2[%c0_3, %c0_4] : memref<3x128xf32, #tpu.memory_space<vmem>>, vector<1x128xf32>
    %3 = arith.truncf %0 : vector<64x128xf32> to vector<64x128xbf16>
    %cst = arith.constant dense<0.000000e+00> : vector<64x128xf32>
    %4 = tpu.matmul %3, %1, %cst {dimension_numbers = #tpu.dot_dimension_numbers<[1], [0], [0], [1], [0, 0, 1, 1], [], []>} : vector<64x128xbf16>, vector<128x128xbf16>, vector<64x128xf32> -> vector<64x128xf32>
    %5 = vector.broadcast %2 : vector<1x128xf32> to vector<64x128xf32>
    %6 = arith.addf %4, %5 : vector<64x128xf32>
    %7 = arith.negf %6 : vector<64x128xf32>
    %8 = math.exp %7 : vector<64x128xf32>
    %cst_5 = arith.constant 1.000000e+00 : f32
    %9 = vector.broadcast %cst_5 : f32 to vector<64x128xf32>
    %10 = arith.addf %9, %8 : vector<64x128xf32>
    %11 = arith.divf %9, %10 : vector<64x128xf32>
    %cst_6 = arith.constant dense<0.000000e+00> : vector<128xf32>
    %12 = vector.multi_reduction <add>, %11, %cst_6 [0] : vector<64x128xf32> to vector<128xf32>
    %13 = vector.shape_cast %12 : vector<128xf32> to vector<1x128xf32>
    %14 = arith.mulf %11, %11 : vector<64x128xf32>
    %cst_7 = arith.constant dense<0.000000e+00> : vector<128xf32>
    %15 = vector.multi_reduction <add>, %14, %cst_7 [0] : vector<64x128xf32> to vector<128xf32>
    %16 = vector.shape_cast %15 : vector<128xf32> to vector<1x128xf32>
    %cst_8 = arith.constant 1.562500e-02 : f32
    %17 = vector.broadcast %cst_8 : f32 to vector<1x128xf32>
    %18 = arith.mulf %13, %17 : vector<1x128xf32>
    %cst_9 = arith.constant 1.562500e-02 : f32
    %19 = vector.broadcast %cst_9 : f32 to vector<1x128xf32>
    %20 = arith.mulf %16, %19 : vector<1x128xf32>
    %21 = arith.mulf %18, %18 : vector<1x128xf32>
    %22 = arith.subf %20, %21 : vector<1x128xf32>
    %cst_10 = arith.constant 0.000000e+00 : f32
    %23 = vector.broadcast %cst_10 : f32 to vector<1x128xf32>
    %24 = arith.maximumf %22, %23 : vector<1x128xf32>
    %25 = vector.broadcast %18 : vector<1x128xf32> to vector<64x128xf32>
    %26 = arith.subf %11, %25 : vector<64x128xf32>
    %cst_11 = arith.constant 9.99999974E-6 : f32
    %27 = vector.broadcast %cst_11 : f32 to vector<1x128xf32>
    %28 = arith.addf %24, %27 : vector<1x128xf32>
    %29 = math.rsqrt %28 : vector<1x128xf32>
    %30 = vector.broadcast %29 : vector<1x128xf32> to vector<64x128xf32>
    %31 = arith.mulf %26, %30 : vector<64x128xf32>
    %c128 = arith.constant 128 : index
    %c0_12 = arith.constant 0 : index
    %32 = vector.load %arg1[%c128, %c0_12] : memref<384x128xbf16, #tpu.memory_space<vmem>>, vector<128x128xbf16>
    %c1 = arith.constant 1 : index
    %c0_13 = arith.constant 0 : index
    %33 = vector.load %arg2[%c1, %c0_13] : memref<3x128xf32, #tpu.memory_space<vmem>>, vector<1x128xf32>
    %34 = arith.truncf %31 : vector<64x128xf32> to vector<64x128xbf16>
    %cst_14 = arith.constant dense<0.000000e+00> : vector<64x128xf32>
    %35 = tpu.matmul %34, %32, %cst_14 {dimension_numbers = #tpu.dot_dimension_numbers<[1], [0], [0], [1], [0, 0, 1, 1], [], []>} : vector<64x128xbf16>, vector<128x128xbf16>, vector<64x128xf32> -> vector<64x128xf32>
    %36 = vector.broadcast %33 : vector<1x128xf32> to vector<64x128xf32>
    %37 = arith.addf %35, %36 : vector<64x128xf32>
    %38 = arith.negf %37 : vector<64x128xf32>
    %39 = math.exp %38 : vector<64x128xf32>
    %cst_15 = arith.constant 1.000000e+00 : f32
    %40 = vector.broadcast %cst_15 : f32 to vector<64x128xf32>
    %41 = arith.addf %40, %39 : vector<64x128xf32>
    %42 = arith.divf %40, %41 : vector<64x128xf32>
    %cst_16 = arith.constant dense<0.000000e+00> : vector<128xf32>
    %43 = vector.multi_reduction <add>, %42, %cst_16 [0] : vector<64x128xf32> to vector<128xf32>
    %44 = vector.shape_cast %43 : vector<128xf32> to vector<1x128xf32>
    %45 = arith.mulf %42, %42 : vector<64x128xf32>
    %cst_17 = arith.constant dense<0.000000e+00> : vector<128xf32>
    %46 = vector.multi_reduction <add>, %45, %cst_17 [0] : vector<64x128xf32> to vector<128xf32>
    %47 = vector.shape_cast %46 : vector<128xf32> to vector<1x128xf32>
    %cst_18 = arith.constant 1.562500e-02 : f32
    %48 = vector.broadcast %cst_18 : f32 to vector<1x128xf32>
    %49 = arith.mulf %44, %48 : vector<1x128xf32>
    %cst_19 = arith.constant 1.562500e-02 : f32
    %50 = vector.broadcast %cst_19 : f32 to vector<1x128xf32>
    %51 = arith.mulf %47, %50 : vector<1x128xf32>
    %52 = arith.mulf %49, %49 : vector<1x128xf32>
    %53 = arith.subf %51, %52 : vector<1x128xf32>
    %cst_20 = arith.constant 0.000000e+00 : f32
    %54 = vector.broadcast %cst_20 : f32 to vector<1x128xf32>
    %55 = arith.maximumf %53, %54 : vector<1x128xf32>
    %56 = vector.broadcast %49 : vector<1x128xf32> to vector<64x128xf32>
    %57 = arith.subf %42, %56 : vector<64x128xf32>
    %cst_21 = arith.constant 9.99999974E-6 : f32
    %58 = vector.broadcast %cst_21 : f32 to vector<1x128xf32>
    %59 = arith.addf %55, %58 : vector<1x128xf32>
    %60 = math.rsqrt %59 : vector<1x128xf32>
    %61 = vector.broadcast %60 : vector<1x128xf32> to vector<64x128xf32>
    %62 = arith.mulf %57, %61 : vector<64x128xf32>
    %c256 = arith.constant 256 : index
    %c0_22 = arith.constant 0 : index
    %63 = vector.load %arg1[%c256, %c0_22] : memref<384x128xbf16, #tpu.memory_space<vmem>>, vector<128x128xbf16>
    %c2 = arith.constant 2 : index
    %c0_23 = arith.constant 0 : index
    %64 = vector.load %arg2[%c2, %c0_23] : memref<3x128xf32, #tpu.memory_space<vmem>>, vector<1x128xf32>
    %cst_24 = arith.constant dense<0.000000e+00> : vector<128xf32>
    %65 = vector.multi_reduction <add>, %62, %cst_24 [0] : vector<64x128xf32> to vector<128xf32>
    %66 = vector.shape_cast %65 : vector<128xf32> to vector<1x128xf32>
    %67 = arith.mulf %62, %62 : vector<64x128xf32>
    %cst_25 = arith.constant dense<0.000000e+00> : vector<128xf32>
    %68 = vector.multi_reduction <add>, %67, %cst_25 [0] : vector<64x128xf32> to vector<128xf32>
    %69 = vector.shape_cast %68 : vector<128xf32> to vector<1x128xf32>
    %cst_26 = arith.constant 1.562500e-02 : f32
    %70 = vector.broadcast %cst_26 : f32 to vector<1x128xf32>
    %71 = arith.mulf %66, %70 : vector<1x128xf32>
    %cst_27 = arith.constant 1.562500e-02 : f32
    %72 = vector.broadcast %cst_27 : f32 to vector<1x128xf32>
    %73 = arith.mulf %69, %72 : vector<1x128xf32>
    %74 = arith.mulf %71, %71 : vector<1x128xf32>
    %75 = arith.subf %73, %74 : vector<1x128xf32>
    %cst_28 = arith.constant 0.000000e+00 : f32
    %76 = vector.broadcast %cst_28 : f32 to vector<1x128xf32>
    %77 = arith.maximumf %75, %76 : vector<1x128xf32>
    %78 = vector.broadcast %71 : vector<1x128xf32> to vector<64x128xf32>
    %79 = arith.subf %62, %78 : vector<64x128xf32>
    %cst_29 = arith.constant 9.99999974E-6 : f32
    %80 = vector.broadcast %cst_29 : f32 to vector<1x128xf32>
    %81 = arith.addf %77, %80 : vector<1x128xf32>
    %82 = math.rsqrt %81 : vector<1x128xf32>
    %83 = vector.broadcast %82 : vector<1x128xf32> to vector<64x128xf32>
    %84 = arith.mulf %79, %83 : vector<64x128xf32>
    %85 = arith.truncf %84 : vector<64x128xf32> to vector<64x128xbf16>
    %cst_30 = arith.constant dense<0.000000e+00> : vector<64x128xf32>
    %86 = tpu.matmul %85, %63, %cst_30 {dimension_numbers = #tpu.dot_dimension_numbers<[1], [0], [0], [1], [0, 0, 1, 1], [], []>} : vector<64x128xbf16>, vector<128x128xbf16>, vector<64x128xf32> -> vector<64x128xf32>
    %87 = vector.broadcast %64 : vector<1x128xf32> to vector<64x128xf32>
    %88 = arith.addf %86, %87 : vector<64x128xf32>
    %c0_31 = arith.constant 0 : index
    %c0_32 = arith.constant 0 : index
    %89 = vector.load %arg3[%c0_31, %c0_32] : memref<64x128xf32, #tpu.memory_space<vmem>>, vector<64x128xf32>
    tpu.vector_store %arg3[%c0_31, %c0_32], %88 {strides = array<i32>} : memref<64x128xf32, #tpu.memory_space<vmem>>, vector<64x128xf32>,
    return
  }
}

</mosaic_0001>

<llo_original>
// kernel: mlp_net_forward.1
$region0: #{mlp_net_forward.1}
  #allocation0 [shape = 'u32[]', space=smem, size = 0x4, offset = 0x4, fixed_abs, tag = 'smem constant byte address 0x4 - core index']
  #allocation1 [shape = 'u32[144,128]{1,0:T(1,128)}', space=vmem, size = 0x12000, scoped, tag = 'internal scratch']
  %s0 = inlined_call_operand.vmem [shape: f32[64,128], index: 0, kind: input, shape index: {}]
  %s1 = inlined_call_operand.vmem [shape: bf16[384,128], index: 1, kind: input, shape index: {}]
  %s2 = inlined_call_operand.vmem [shape: f32[3,128], index: 2, kind: input, shape index: {}]
  %s3 = inlined_call_operand.vmem [shape: f32[64,128], index: 3, kind: output, shape index: {}]
  %s4 = sld [smem:[#allocation0]]
  $region22: #{mlp_net_forward.1} parent=0
    _
  %s6 = ssub.s32 1, %s4
  %s7 = scalar_select 0, %s6, %s4
  // Predicated region
  $region2: #{mlp_net_forward.1} parent=0 // pred_check
    _
  $region3: #{mlp_net_forward.1} parent=0 // pred_check_branch
    %9 = sbr.rel (0) target = $region5
  $region4: #{mlp_net_forward.1} parent=0 // pred_region
    _
  $region5: #{mlp_net_forward.1} parent=0 // pred_fallthru
    _
  // Predicated region
  $region6: #{mlp_net_forward.1} parent=0 // pred_check
    _
  $region7: #{mlp_net_forward.1} parent=0 // pred_check_branch
    %11 = sbr.rel (0) target = $region9
  $region8: #{mlp_net_forward.1} parent=0 // pred_region
    _
  $region9: #{mlp_net_forward.1} parent=0 // pred_fallthru
    _
  // Predicated region
  $region10: #{mlp_net_forward.1} parent=0 // pred_check
    _
  $region11: #{mlp_net_forward.1} parent=0 // pred_check_branch
    %13 = sbr.rel (0) target = $region13
  $region12: #{mlp_net_forward.1} parent=0 // pred_region
    _
  $region13: #{mlp_net_forward.1} parent=0 // pred_fallthru
    _
  %v15 = vld [vmem:[%s0] sm:$0xff]
  %v16 = vld [vmem:[%s0 + $0x8] sm:$0xff]
  %v17 = vld [vmem:[%s0 + $0x10] sm:$0xff]
  %v18 = vld [vmem:[%s0 + $0x18] sm:$0xff]
  %v19 = vld [vmem:[%s0 + $0x20] sm:$0xff]
  %v20 = vld [vmem:[%s0 + $0x28] sm:$0xff]
  %v21 = vld [vmem:[%s0 + $0x30] sm:$0xff]
  %v22 = vld [vmem:[%s0 + $0x38] sm:$0xff]
  %v23 = vld [vmem:[%s1] sm:$0xf]
  %v24 = vld [vmem:[%s1 + $0x4] sm:$0xf]
  %v25 = vld [vmem:[%s1 + $0x8] sm:$0xf]
  %v26 = vld [vmem:[%s1 + $0xc] sm:$0xf]
  %v27 = vld [vmem:[%s1 + $0x10] sm:$0xf]
  %v28 = vld [vmem:[%s1 + $0x14] sm:$0xf]
  %v29 = vld [vmem:[%s1 + $0x18] sm:$0xf]
  %v30 = vld [vmem:[%s1 + $0x1c] sm:$0xf]
  %v31 = vld [vmem:[%s1 + $0x20] sm:$0xf]
  %v32 = vld [vmem:[%s1 + $0x24] sm:$0xf]
  %v33 = vld [vmem:[%s1 + $0x28] sm:$0xf]
  %v34 = vld [vmem:[%s1 + $0x2c] sm:$0xf]
  %v35 = vld [vmem:[%s1 + $0x30] sm:$0xf]
  %v36 = vld [vmem:[%s1 + $0x34] sm:$0xf]
  %v37 = vld [vmem:[%s1 + $0x38] sm:$0xf]
  %v38 = vld [vmem:[%s1 + $0x3c] sm:$0xf]
  %v39 = vld [vmem:[%s2] sm:$0x1]
  %v40 = vpack.c.bf16 %v16, %v15
  %v41 = vpack.c.bf16 %v18, %v17
  %v42 = vpack.c.bf16 %v20, %v19
  %v43 = vpack.c.bf16 %v22, %v21
  %v44 = vlaneseq
  %v45 = vshrl.u32 %v44, 7
  %v46 = vsub.s32 0, %v45
  %v47 = vrot.slane %v39, %v46
  %v64 = vunpack.c.l.b16 %v23
  %v65 = vunpack.c.l.b16 %v24
  %v66 = vunpack.c.l.b16 %v25
  %v67 = vunpack.c.l.b16 %v26
  %v68 = vunpack.c.l.b16 %v27
  %v69 = vunpack.c.l.b16 %v28
  %v70 = vunpack.c.l.b16 %v29
  %v71 = vunpack.c.l.b16 %v30
  %v72 = vunpack.c.l.b16 %v31
  %v73 = vunpack.c.l.b16 %v32
  %v74 = vunpack.c.l.b16 %v33
  %v75 = vunpack.c.l.b16 %v34
  %v76 = vunpack.c.l.b16 %v35
  %v77 = vunpack.c.l.b16 %v36
  %v78 = vunpack.c.l.b16 %v37
  %v79 = vunpack.c.l.b16 %v38
  %v80 = vpack.c.b16 %v65, %v64
  %v81 = vpack.c.b16 %v67, %v66
  %v82 = vpack.c.b16 %v69, %v68
  %v83 = vpack.c.b16 %v71, %v70
  %v84 = vpack.c.b16 %v73, %v72
  %v85 = vpack.c.b16 %v75, %v74
  %v86 = vpack.c.b16 %v77, %v76
  %v87 = vpack.c.b16 %v79, %v78
  %96 = vmatprep.subr.bf16.mxu0 0
  %97 = vmatpush1.bf16.msra.mxu0 %v80
  %98 = vmatprep.subr.bf16.mxu0 0
  %99 = vmatpush1.bf16.msra.mxu0 %v81
  %100 = vmatprep.subr.bf16.mxu0 0
  %101 = vmatpush1.bf16.msra.mxu0 %v82
  %102 = vmatprep.subr.bf16.mxu0 0
  %103 = vmatpush1.bf16.msra.mxu0 %v83
  %104 = vmatprep.subr.bf16.mxu0 0
  %105 = vmatpush1.bf16.msra.mxu0 %v84
  %106 = vmatprep.subr.bf16.mxu0 0
  %107 = vmatpush1.bf16.msra.mxu0 %v85
  %108 = vmatprep.subr.bf16.mxu0 0
  %109 = vmatpush1.bf16.msra.mxu0 %v86
  %110 = vmatprep.subr.bf16.mxu0 0
  %111 = vmatpush1.bf16.msra.mxu0 %v87
  %112 = vmatprep.subr.bf16.mxu0 0
  %113 = vmatpush1.bf16.msra.mxu0 0
  %114 = vmatprep.subr.bf16.mxu0 0
  %115 = vmatpush1.bf16.msra.mxu0 0
  %116 = vmatprep.subr.bf16.mxu0 0
  %117 = vmatpush1.bf16.msra.mxu0 0
  %118 = vmatprep.subr.bf16.mxu0 0
  %119 = vmatpush1.bf16.msra.mxu0 0
  %120 = vmatprep.subr.bf16.mxu0 0
  %121 = vmatpush1.bf16.msra.mxu0 0
  %122 = vmatprep.subr.bf16.mxu0 0
  %123 = vmatpush1.bf16.msra.mxu0 0
  %124 = vmatprep.subr.bf16.mxu0 0
  %125 = vmatpush1.bf16.msra.mxu0 0
  %126 = vmatprep.subr.bf16.mxu0 0
  %127 = vmatpush1.bf16.msra.mxu0 0
  %128 = vmatprep.mubr.bf16.mxu0 0
  %129 = vmatmul.mubr.bf16.gmra.mrb[0].mxu0 %v40
  %v130 = vpop.f32.mrb[0].mxu0
  %v131 = vadd.f32 %v47, %v130
  %v132 = vpop.f32.mrb[0].mxu0
  %v133 = vpop.f32.mrb[0].mxu0
  %v134 = vadd.f32 %v47, %v133
  %v135 = vpop.f32.mrb[0].mxu0
  %136 = vmatprep.mubr.bf16.mxu0 0
  %137 = vmatmul.mubr.bf16.gmra.mrb[0].mxu0 %v41
  %v138 = vpop.f32.mrb[0].mxu0
  %v139 = vadd.f32 %v47, %v138
  %v140 = vpop.f32.mrb[0].mxu0
  %v141 = vpop.f32.mrb[0].mxu0
  %v142 = vadd.f32 %v47, %v141
  %v143 = vpop.f32.mrb[0].mxu0
  %144 = vmatprep.mubr.bf16.mxu0 0
  %145 = vmatmul.mubr.bf16.gmra.mrb[0].mxu0 %v42
  %v146 = vpop.f32.mrb[0].mxu0
  %v147 = vadd.f32 %v47, %v146
  %v148 = vpop.f32.mrb[0].mxu0
  %v149 = vpop.f32.mrb[0].mxu0
  %v150 = vadd.f32 %v47, %v149
  %v151 = vpop.f32.mrb[0].mxu0
  %152 = vmatprep.mubr.bf16.mxu0 0
  %153 = vmatmul.mubr.bf16.gmra.mrb[0].mxu0 %v43
  %v154 = vpop.f32.mrb[0].mxu0
  %v155 = vadd.f32 %v47, %v154
  %v156 = vpop.f32.mrb[0].mxu0
  %v157 = vpop.f32.mrb[0].mxu0
  %v158 = vadd.f32 %v47, %v157
  %v159 = vpop.f32.mrb[0].mxu0
  %160 = vdwg.mxu0
  %v161 = vxor.u32 %v131, 2147483648
  %v162 = vxor.u32 %v134, 2147483648
  %v163 = vxor.u32 %v139, 2147483648
  %v164 = vxor.u32 %v142, 2147483648
  %v165 = vxor.u32 %v147, 2147483648
  %v166 = vxor.u32 %v150, 2147483648
  %v167 = vxor.u32 %v155, 2147483648
  %v168 = vxor.u32 %v158, 2147483648
  %v169 = vmul.f32 %v161, 1.442695
  %v170 = vpow.pop %v169
  %v171 = vmul.f32 %v162, 1.442695
  %v172 = vpow.pop %v171
  %v173 = vmul.f32 %v163, 1.442695
  %v174 = vpow.pop %v173
  %v175 = vmul.f32 %v164, 1.442695
  %v176 = vpow.pop %v175
  %v177 = vmul.f32 %v165, 1.442695
  %v178 = vpow.pop %v177
  %v179 = vmul.f32 %v166, 1.442695
  %v180 = vpow.pop %v179
  %v181 = vmul.f32 %v167, 1.442695
  %v182 = vpow.pop %v181
  %v183 = vmul.f32 %v168, 1.442695
  %v184 = vpow.pop %v183
  %v185 = vadd.f32 %v170, 1.0
  %v186 = vadd.f32 %v172, 1.0
  %v187 = vadd.f32 %v174, 1.0
  %v188 = vadd.f32 %v176, 1.0
  %v189 = vadd.f32 %v178, 1.0
  %v190 = vadd.f32 %v180, 1.0
  %v191 = vadd.f32 %v182, 1.0
  %v192 = vadd.f32 %v184, 1.0
  %v193 = vrcp.pop %v185
  %v194 = vmul.f32 1.0, %v193
  %v195 = vrcp.pop %v186
  %v196 = vmul.f32 1.0, %v195
  %v197 = vrcp.pop %v187
  %v198 = vmul.f32 1.0, %v197
  %v199 = vrcp.pop %v188
  %v200 = vmul.f32 1.0, %v199
  %v201 = vrcp.pop %v189
  %v202 = vmul.f32 1.0, %v201
  %v203 = vrcp.pop %v190
  %v204 = vmul.f32 1.0, %v203
  %v205 = vrcp.pop %v191
  %v206 = vmul.f32 1.0, %v205
  %v207 = vrcp.pop %v192
  %v208 = vmul.f32 1.0, %v207
  %v209 = vadd.f32 %v194, %v196
  %v210 = vadd.f32 %v209, %v198
  %v211 = vadd.f32 %v210, %v200
  %v212 = vadd.f32 %v211, %v202
  %v213 = vadd.f32 %v212, %v204
  %v214 = vadd.f32 %v213, %v206
  %v215 = vadd.f32 %v214, %v208
  %v216 = vrot.slane %v215, 4
  %v217 = vadd.f32 %v215, %v216
  %v218 = vrot.slane %v217, 2
  %v219 = vadd.f32 %v217, %v218
  %v220 = vrot.slane %v219, 1
  %v221 = vadd.f32 %v219, %v220
  %v222 = vmul.f32 %v194, %v194
  %v223 = vmul.f32 %v196, %v196
  %v224 = vmul.f32 %v198, %v198
  %v225 = vmul.f32 %v200, %v200
  %v226 = vmul.f32 %v202, %v202
  %v227 = vmul.f32 %v204, %v204
  %v228 = vmul.f32 %v206, %v206
  %v229 = vmul.f32 %v208, %v208
  %v230 = vadd.f32 %v222, %v223
  %v231 = vadd.f32 %v230, %v224
  %v232 = vadd.f32 %v231, %v225
  %v233 = vadd.f32 %v232, %v226
  %v234 = vadd.f32 %v233, %v227
  %v235 = vadd.f32 %v234, %v228
  %v236 = vadd.f32 %v235, %v229
  %v237 = vrot.slane %v236, 4
  %v238 = vadd.f32 %v236, %v237
  %v239 = vrot.slane %v238, 2
  %v240 = vadd.f32 %v238, %v239
  %v241 = vrot.slane %v240, 1
  %v242 = vadd.f32 %v240, %v241
  %v243 = vmul.f32 %v221, 0.015625
  %v244 = vmul.f32 %v242, 0.015625
  %v245 = vmul.f32 %v243, %v243
  %v246 = vsub.f32 %v244, %v245
  %v247 = vmax.f32 %v246, 0.0
  %v248 = vsub.f32 %v194, %v243
  %v249 = vsub.f32 %v196, %v243
  %v250 = vsub.f32 %v198, %v243
  %v251 = vsub.f32 %v200, %v243
  %v252 = vsub.f32 %v202, %v243
  %v253 = vsub.f32 %v204, %v243
  %v254 = vsub.f32 %v206, %v243
  %v255 = vsub.f32 %v208, %v243
  %v256 = vadd.f32 %v247, 1e-05
  %v257 = vrsqrt.pop %v256
  %v258 = vmul.f32 %v248, %v257
  %v259 = vmul.f32 %v249, %v257
  %v260 = vmul.f32 %v250, %v257
  %v261 = vmul.f32 %v251, %v257
  %v262 = vmul.f32 %v252, %v257
  %v263 = vmul.f32 %v253, %v257
  %v264 = vmul.f32 %v254, %v257
  %v265 = vmul.f32 %v255, %v257
  %v266 = vld [vmem:[%s1 + $0x40] sm:$0xf]
  %v267 = vld [vmem:[%s1 + $0x44] sm:$0xf]
  %v268 = vld [vmem:[%s1 + $0x48] sm:$0xf]
  %v269 = vld [vmem:[%s1 + $0x4c] sm:$0xf]
  %v270 = vld [vmem:[%s1 + $0x50] sm:$0xf]
  %v271 = vld [vmem:[%s1 + $0x54] sm:$0xf]
  %v272 = vld [vmem:[%s1 + $0x58] sm:$0xf]
  %v273 = vld [vmem:[%s1 + $0x5c] sm:$0xf]
  %v274 = vld [vmem:[%s1 + $0x60] sm:$0xf]
  %v275 = vld [vmem:[%s1 + $0x64] sm:$0xf]
  %v276 = vld [vmem:[%s1 + $0x68] sm:$0xf]
  %v277 = vld [vmem:[%s1 + $0x6c] sm:$0xf]
  %v278 = vld [vmem:[%s1 + $0x70] sm:$0xf]
  %v279 = vld [vmem:[%s1 + $0x74] sm:$0xf]
  %v280 = vld [vmem:[%s1 + $0x78] sm:$0xf]
  %v281 = vld [vmem:[%s1 + $0x7c] sm:$0xf]
  %v282 = vld [vmem:[%s2 + $0x1] sm:$0x1]
  %v283 = vpack.c.bf16 %v259, %v258
  %v284 = vpack.c.bf16 %v261, %v260
  %v285 = vpack.c.bf16 %v263, %v262
  %v286 = vpack.c.bf16 %v265, %v264
  %v287 = vlaneseq
  %v288 = vshrl.u32 %v287, 7
  %v289 = vsub.s32 0, %v288
  %v290 = vrot.slane %v282, %v289
  %v307 = vunpack.c.l.b16 %v266
  %v308 = vunpack.c.l.b16 %v267
  %v309 = vunpack.c.l.b16 %v268
  %v310 = vunpack.c.l.b16 %v269
  %v311 = vunpack.c.l.b16 %v270
  %v312 = vunpack.c.l.b16 %v271
  %v313 = vunpack.c.l.b16 %v272
  %v314 = vunpack.c.l.b16 %v273
  %v315 = vunpack.c.l.b16 %v274
  %v316 = vunpack.c.l.b16 %v275
  %v317 = vunpack.c.l.b16 %v276
  %v318 = vunpack.c.l.b16 %v277
  %v319 = vunpack.c.l.b16 %v278
  %v320 = vunpack.c.l.b16 %v279
  %v321 = vunpack.c.l.b16 %v280
  %v322 = vunpack.c.l.b16 %v281
  %v323 = vpack.c.b16 %v308, %v307
  %v324 = vpack.c.b16 %v310, %v309
  %v325 = vpack.c.b16 %v312, %v311
  %v326 = vpack.c.b16 %v314, %v313
  %v327 = vpack.c.b16 %v316, %v315
  %v328 = vpack.c.b16 %v318, %v317
  %v329 = vpack.c.b16 %v320, %v319
  %v330 = vpack.c.b16 %v322, %v321
  %339 = vmatprep.subr.bf16.mxu0 0
  %340 = vmatpush1.bf16.msra.mxu0 %v323
  %341 = vmatprep.subr.bf16.mxu0 0
  %342 = vmatpush1.bf16.msra.mxu0 %v324
  %343 = vmatprep.subr.bf16.mxu0 0
  %344 = vmatpush1.bf16.msra.mxu0 %v325
  %345 = vmatprep.subr.bf16.mxu0 0
  %346 = vmatpush1.bf16.msra.mxu0 %v326
  %347 = vmatprep.subr.bf16.mxu0 0
  %348 = vmatpush1.bf16.msra.mxu0 %v327
  %349 = vmatprep.subr.bf16.mxu0 0
  %350 = vmatpush1.bf16.msra.mxu0 %v328
  %351 = vmatprep.subr.bf16.mxu0 0
  %352 = vmatpush1.bf16.msra.mxu0 %v329
  %353 = vmatprep.subr.bf16.mxu0 0
  %354 = vmatpush1.bf16.msra.mxu0 %v330
  %355 = vmatprep.subr.bf16.mxu0 0
  %356 = vmatpush1.bf16.msra.mxu0 0
  %357 = vmatprep.subr.bf16.mxu0 0
  %358 = vmatpush1.bf16.msra.mxu0 0
  %359 = vmatprep.subr.bf16.mxu0 0
  %360 = vmatpush1.bf16.msra.mxu0 0
  %361 = vmatprep.subr.bf16.mxu0 0
  %362 = vmatpush1.bf16.msra.mxu0 0
  %363 = vmatprep.subr.bf16.mxu0 0
  %364 = vmatpush1.bf16.msra.mxu0 0
  %365 = vmatprep.subr.bf16.mxu0 0
  %366 = vmatpush1.bf16.msra.mxu0 0
  %367 = vmatprep.subr.bf16.mxu0 0
  %368 = vmatpush1.bf16.msra.mxu0 0
  %369 = vmatprep.subr.bf16.mxu0 0
  %370 = vmatpush1.bf16.msra.mxu0 0
  %371 = vmatprep.mubr.bf16.mxu0 0
  %372 = vmatmul.mubr.bf16.gmra.mrb[0].mxu0 %v283
  %v373 = vpop.f32.mrb[0].mxu0
  %v374 = vadd.f32 %v290, %v373
  %v375 = vpop.f32.mrb[0].mxu0
  %v376 = vpop.f32.mrb[0].mxu0
  %v377 = vadd.f32 %v290, %v376
  %v378 = vpop.f32.mrb[0].mxu0
  %379 = vmatprep.mubr.bf16.mxu0 0
  %380 = vmatmul.mubr.bf16.gmra.mrb[0].mxu0 %v284
  %v381 = vpop.f32.mrb[0].mxu0
  %v382 = vadd.f32 %v290, %v381
  %v383 = vpop.f32.mrb[0].mxu0
  %v384 = vpop.f32.mrb[0].mxu0
  %v385 = vadd.f32 %v290, %v384
  %v386 = vpop.f32.mrb[0].mxu0
  %387 = vmatprep.mubr.bf16.mxu0 0
  %388 = vmatmul.mubr.bf16.gmra.mrb[0].mxu0 %v285
  %v389 = vpop.f32.mrb[0].mxu0
  %v390 = vadd.f32 %v290, %v389
  %v391 = vpop.f32.mrb[0].mxu0
  %v392 = vpop.f32.mrb[0].mxu0
  %v393 = vadd.f32 %v290, %v392
  %v394 = vpop.f32.mrb[0].mxu0
  %395 = vmatprep.mubr.bf16.mxu0 0
  %396 = vmatmul.mubr.bf16.gmra.mrb[0].mxu0 %v286
  %v397 = vpop.f32.mrb[0].mxu0
  %v398 = vadd.f32 %v290, %v397
  %v399 = vpop.f32.mrb[0].mxu0
  %v400 = vpop.f32.mrb[0].mxu0
  %v401 = vadd.f32 %v290, %v400
  %v402 = vpop.f32.mrb[0].mxu0
  %403 = vdwg.mxu0
  %v404 = vxor.u32 %v374, 2147483648
  %v405 = vxor.u32 %v377, 2147483648
  %v406 = vxor.u32 %v382, 2147483648
  %v407 = vxor.u32 %v385, 2147483648
  %v408 = vxor.u32 %v390, 2147483648
  %v409 = vxor.u32 %v393, 2147483648
  %v410 = vxor.u32 %v398, 2147483648
  %v411 = vxor.u32 %v401, 2147483648
  %v412 = vmul.f32 %v404, 1.442695
  %v413 = vpow.pop %v412
  %v414 = vmul.f32 %v405, 1.442695
  %v415 = vpow.pop %v414
  %v416 = vmul.f32 %v406, 1.442695
  %v417 = vpow.pop %v416
  %v418 = vmul.f32 %v407, 1.442695
  %v419 = vpow.pop %v418
  %v420 = vmul.f32 %v408, 1.442695
  %v421 = vpow.pop %v420
  %v422 = vmul.f32 %v409, 1.442695
  %v423 = vpow.pop %v422
  %v424 = vmul.f32 %v410, 1.442695
  %v425 = vpow.pop %v424
  %v426 = vmul.f32 %v411, 1.442695
  %v427 = vpow.pop %v426
  %v428 = vadd.f32 %v413, 1.0
  %v429 = vadd.f32 %v415, 1.0
  %v430 = vadd.f32 %v417, 1.0
  %v431 = vadd.f32 %v419, 1.0
  %v432 = vadd.f32 %v421, 1.0
  %v433 = vadd.f32 %v423, 1.0
  %v434 = vadd.f32 %v425, 1.0
  %v435 = vadd.f32 %v427, 1.0
  %v436 = vrcp.pop %v428
  %v437 = vmul.f32 1.0, %v436
  %v438 = vrcp.pop %v429
  %v439 = vmul.f32 1.0, %v438
  %v440 = vrcp.pop %v430
  %v441 = vmul.f32 1.0, %v440
  %v442 = vrcp.pop %v431
  %v443 = vmul.f32 1.0, %v442
  %v444 = vrcp.pop %v432
  %v445 = vmul.f32 1.0, %v444
  %v446 = vrcp.pop %v433
  %v447 = vmul.f32 1.0, %v446
  %v448 = vrcp.pop %v434
  %v449 = vmul.f32 1.0, %v448
  %v450 = vrcp.pop %v435
  %v451 = vmul.f32 1.0, %v450
  %v452 = vadd.f32 %v437, %v439
  %v453 = vadd.f32 %v452, %v441
  %v454 = vadd.f32 %v453, %v443
  %v455 = vadd.f32 %v454, %v445
  %v456 = vadd.f32 %v455, %v447
  %v457 = vadd.f32 %v456, %v449
  %v458 = vadd.f32 %v457, %v451
  %v459 = vrot.slane %v458, 4
  %v460 = vadd.f32 %v458, %v459
  %v461 = vrot.slane %v460, 2
  %v462 = vadd.f32 %v460, %v461
  %v463 = vrot.slane %v462, 1
  %v464 = vadd.f32 %v462, %v463
  %v465 = vmul.f32 %v437, %v437
  %v466 = vmul.f32 %v439, %v439
  %v467 = vmul.f32 %v441, %v441
  %v468 = vmul.f32 %v443, %v443
  %v469 = vmul.f32 %v445, %v445
  %v470 = vmul.f32 %v447, %v447
  %v471 = vmul.f32 %v449, %v449
  %v472 = vmul.f32 %v451, %v451
  %v473 = vadd.f32 %v465, %v466
  %v474 = vadd.f32 %v473, %v467
  %v475 = vadd.f32 %v474, %v468
  %v476 = vadd.f32 %v475, %v469
  %v477 = vadd.f32 %v476, %v470
  %v478 = vadd.f32 %v477, %v471
  %v479 = vadd.f32 %v478, %v472
  %v480 = vrot.slane %v479, 4
  %v481 = vadd.f32 %v479, %v480
  %v482 = vrot.slane %v481, 2
  %v483 = vadd.f32 %v481, %v482
  %v484 = vrot.slane %v483, 1
  %v485 = vadd.f32 %v483, %v484
  %v486 = vmul.f32 %v464, 0.015625
  %v487 = vmul.f32 %v485, 0.015625
  %v488 = vmul.f32 %v486, %v486
  %v489 = vsub.f32 %v487, %v488
  %v490 = vmax.f32 %v489, 0.0
  %v491 = vsub.f32 %v437, %v486
  %v492 = vsub.f32 %v439, %v486
  %v493 = vsub.f32 %v441, %v486
  %v494 = vsub.f32 %v443, %v486
  %v495 = vsub.f32 %v445, %v486
  %v496 = vsub.f32 %v447, %v486
  %v497 = vsub.f32 %v449, %v486
  %v498 = vsub.f32 %v451, %v486
  %v499 = vadd.f32 %v490, 1e-05
  %v500 = vrsqrt.pop %v499
  %v501 = vmul.f32 %v491, %v500
  %v502 = vmul.f32 %v492, %v500
  %v503 = vmul.f32 %v493, %v500
  %v504 = vmul.f32 %v494, %v500
  %v505 = vmul.f32 %v495, %v500
  %v506 = vmul.f32 %v496, %v500
  %v507 = vmul.f32 %v497, %v500
  %v508 = vmul.f32 %v498, %v500
  %v509 = vld [vmem:[%s1 + $0x80] sm:$0xf]
  %v510 = vld [vmem:[%s1 + $0x84] sm:$0xf]
  %v511 = vld [vmem:[%s1 + $0x88] sm:$0xf]
  %v512 = vld [vmem:[%s1 + $0x8c] sm:$0xf]
  %v513 = vld [vmem:[%s1 + $0x90] sm:$0xf]
  %v514 = vld [vmem:[%s1 + $0x94] sm:$0xf]
  %v515 = vld [vmem:[%s1 + $0x98] sm:$0xf]
  %v516 = vld [vmem:[%s1 + $0x9c] sm:$0xf]
  %v517 = vld [vmem:[%s1 + $0xa0] sm:$0xf]
  %v518 = vld [vmem:[%s1 + $0xa4] sm:$0xf]
  %v519 = vld [vmem:[%s1 + $0xa8] sm:$0xf]
  %v520 = vld [vmem:[%s1 + $0xac] sm:$0xf]
  %v521 = vld [vmem:[%s1 + $0xb0] sm:$0xf]
  %v522 = vld [vmem:[%s1 + $0xb4] sm:$0xf]
  %v523 = vld [vmem:[%s1 + $0xb8] sm:$0xf]
  %v524 = vld [vmem:[%s1 + $0xbc] sm:$0xf]
  %v525 = vld [vmem:[%s2 + $0x2] sm:$0x1]
  %v526 = vadd.f32 %v501, %v502
  %v527 = vadd.f32 %v526, %v503
  %v528 = vadd.f32 %v527, %v504
  %v529 = vadd.f32 %v528, %v505
  %v530 = vadd.f32 %v529, %v506
  %v531 = vadd.f32 %v530, %v507
  %v532 = vadd.f32 %v531, %v508
  %v533 = vrot.slane %v532, 4
  %v534 = vadd.f32 %v532, %v533
  %v535 = vrot.slane %v534, 2
  %v536 = vadd.f32 %v534, %v535
  %v537 = vrot.slane %v536, 1
  %v538 = vadd.f32 %v536, %v537
  %v539 = vmul.f32 %v501, %v501
  %v540 = vmul.f32 %v502, %v502
  %v541 = vmul.f32 %v503, %v503
  %v542 = vmul.f32 %v504, %v504
  %v543 = vmul.f32 %v505, %v505
  %v544 = vmul.f32 %v506, %v506
  %v545 = vmul.f32 %v507, %v507
  %v546 = vmul.f32 %v508, %v508
  %v547 = vadd.f32 %v539, %v540
  %v548 = vadd.f32 %v547, %v541
  %v549 = vadd.f32 %v548, %v542
  %v550 = vadd.f32 %v549, %v543
  %v551 = vadd.f32 %v550, %v544
  %v552 = vadd.f32 %v551, %v545
  %v553 = vadd.f32 %v552, %v546
  %v554 = vrot.slane %v553, 4
  %v555 = vadd.f32 %v553, %v554
  %v556 = vrot.slane %v555, 2
  %v557 = vadd.f32 %v555, %v556
  %v558 = vrot.slane %v557, 1
  %v559 = vadd.f32 %v557, %v558
  %v560 = vmul.f32 %v538, 0.015625
  %v561 = vmul.f32 %v559, 0.015625
  %v562 = vmul.f32 %v560, %v560
  %v563 = vsub.f32 %v561, %v562
  %v564 = vmax.f32 %v563, 0.0
  %v565 = vsub.f32 %v501, %v560
  %v566 = vsub.f32 %v502, %v560
  %v567 = vsub.f32 %v503, %v560
  %v568 = vsub.f32 %v504, %v560
  %v569 = vsub.f32 %v505, %v560
  %v570 = vsub.f32 %v506, %v560
  %v571 = vsub.f32 %v507, %v560
  %v572 = vsub.f32 %v508, %v560
  %v573 = vadd.f32 %v564, 1e-05
  %v574 = vrsqrt.pop %v573
  %v575 = vmul.f32 %v565, %v574
  %v576 = vmul.f32 %v566, %v574
  %v577 = vmul.f32 %v567, %v574
  %v578 = vmul.f32 %v568, %v574
  %v579 = vmul.f32 %v569, %v574
  %v580 = vmul.f32 %v570, %v574
  %v581 = vmul.f32 %v571, %v574
  %v582 = vmul.f32 %v572, %v574
  %v583 = vpack.c.bf16 %v576, %v575
  %v584 = vpack.c.bf16 %v578, %v577
  %v585 = vpack.c.bf16 %v580, %v579
  %v586 = vpack.c.bf16 %v582, %v581
  %v587 = vlaneseq
  %v588 = vshrl.u32 %v587, 7
  %v589 = vsub.s32 0, %v588
  %v590 = vrot.slane %v525, %v589
  %v607 = vunpack.c.l.b16 %v509
  %v608 = vunpack.c.l.b16 %v510
  %v609 = vunpack.c.l.b16 %v511
  %v610 = vunpack.c.l.b16 %v512
  %v611 = vunpack.c.l.b16 %v513
  %v612 = vunpack.c.l.b16 %v514
  %v613 = vunpack.c.l.b16 %v515
  %v614 = vunpack.c.l.b16 %v516
  %v615 = vunpack.c.l.b16 %v517
  %v616 = vunpack.c.l.b16 %v518
  %v617 = vunpack.c.l.b16 %v519
  %v618 = vunpack.c.l.b16 %v520
  %v619 = vunpack.c.l.b16 %v521
  %v620 = vunpack.c.l.b16 %v522
  %v621 = vunpack.c.l.b16 %v523
  %v622 = vunpack.c.l.b16 %v524
  %v623 = vpack.c.b16 %v608, %v607
  %v624 = vpack.c.b16 %v610, %v609
  %v625 = vpack.c.b16 %v612, %v611
  %v626 = vpack.c.b16 %v614, %v613
  %v627 = vpack.c.b16 %v616, %v615
  %v628 = vpack.c.b16 %v618, %v617
  %v629 = vpack.c.b16 %v620, %v619
  %v630 = vpack.c.b16 %v622, %v621
  %639 = vmatprep.subr.bf16.mxu0 0
  %640 = vmatpush1.bf16.msra.mxu0 %v623
  %641 = vmatprep.subr.bf16.mxu0 0
  %642 = vmatpush1.bf16.msra.mxu0 %v624
  %643 = vmatprep.subr.bf16.mxu0 0
  %644 = vmatpush1.bf16.msra.mxu0 %v625
  %645 = vmatprep.subr.bf16.mxu0 0
  %646 = vmatpush1.bf16.msra.mxu0 %v626
  %647 = vmatprep.subr.bf16.mxu0 0
  %648 = vmatpush1.bf16.msra.mxu0 %v627
  %649 = vmatprep.subr.bf16.mxu0 0
  %650 = vmatpush1.bf16.msra.mxu0 %v628
  %651 = vmatprep.subr.bf16.mxu0 0
  %652 = vmatpush1.bf16.msra.mxu0 %v629
  %653 = vmatprep.subr.bf16.mxu0 0
  %654 = vmatpush1.bf16.msra.mxu0 %v630
  %655 = vmatprep.subr.bf16.mxu0 0
  %656 = vmatpush1.bf16.msra.mxu0 0
  %657 = vmatprep.subr.bf16.mxu0 0
  %658 = vmatpush1.bf16.msra.mxu0 0
  %659 = vmatprep.subr.bf16.mxu0 0
  %660 = vmatpush1.bf16.msra.mxu0 0
  %661 = vmatprep.subr.bf16.mxu0 0
  %662 = vmatpush1.bf16.msra.mxu0 0
  %663 = vmatprep.subr.bf16.mxu0 0
  %664 = vmatpush1.bf16.msra.mxu0 0
  %665 = vmatprep.subr.bf16.mxu0 0
  %666 = vmatpush1.bf16.msra.mxu0 0
  %667 = vmatprep.subr.bf16.mxu0 0
  %668 = vmatpush1.bf16.msra.mxu0 0
  %669 = vmatprep.subr.bf16.mxu0 0
  %670 = vmatpush1.bf16.msra.mxu0 0
  %671 = vmatprep.mubr.bf16.mxu0 0
  %672 = vmatmul.mubr.bf16.gmra.mrb[0].mxu0 %v583
  %v673 = vpop.f32.mrb[0].mxu0
  %v674 = vadd.f32 %v590, %v673
  %v675 = vpop.f32.mrb[0].mxu0
  %v676 = vpop.f32.mrb[0].mxu0
  %v677 = vadd.f32 %v590, %v676
  %v678 = vpop.f32.mrb[0].mxu0
  %679 = vmatprep.mubr.bf16.mxu0 0
  %680 = vmatmul.mubr.bf16.gmra.mrb[0].mxu0 %v584
  %v681 = vpop.f32.mrb[0].mxu0
  %v682 = vadd.f32 %v590, %v681
  %v683 = vpop.f32.mrb[0].mxu0
  %v684 = vpop.f32.mrb[0].mxu0
  %v685 = vadd.f32 %v590, %v684
  %v686 = vpop.f32.mrb[0].mxu0
  %687 = vmatprep.mubr.bf16.mxu0 0
  %688 = vmatmul.mubr.bf16.gmra.mrb[0].mxu0 %v585
  %v689 = vpop.f32.mrb[0].mxu0
  %v690 = vadd.f32 %v590, %v689
  %v691 = vpop.f32.mrb[0].mxu0
  %v692 = vpop.f32.mrb[0].mxu0
  %v693 = vadd.f32 %v590, %v692
  %v694 = vpop.f32.mrb[0].mxu0
  %695 = vmatprep.mubr.bf16.mxu0 0
  %696 = vmatmul.mubr.bf16.gmra.mrb[0].mxu0 %v586
  %v697 = vpop.f32.mrb[0].mxu0
  %v698 = vadd.f32 %v590, %v697
  %v699 = vpop.f32.mrb[0].mxu0
  %v700 = vpop.f32.mrb[0].mxu0
  %v701 = vadd.f32 %v590, %v700
  %v702 = vpop.f32.mrb[0].mxu0
  %703 = vdwg.mxu0
  %704 = vst [vmem:[%s3] sm:$0xff] %v674
  %705 = vst [vmem:[%s3 + $0x8] sm:$0xff] %v677
  %706 = vst [vmem:[%s3 + $0x10] sm:$0xff] %v682
  %707 = vst [vmem:[%s3 + $0x18] sm:$0xff] %v685
  %708 = vst [vmem:[%s3 + $0x20] sm:$0xff] %v690
  %709 = vst [vmem:[%s3 + $0x28] sm:$0xff] %v693
  %710 = vst [vmem:[%s3 + $0x30] sm:$0xff] %v698
  %711 = vst [vmem:[%s3 + $0x38] sm:$0xff] %v701
  // Predicated region
  $region14: #{mlp_net_forward.1} parent=0 // pred_check
    _
  $region15: #{mlp_net_forward.1} parent=0 // pred_check_branch
    %713 = sbr.rel (0) target = $region17
  $region16: #{mlp_net_forward.1} parent=0 // pred_region
    _
  $region17: #{mlp_net_forward.1} parent=0 // pred_fallthru
    _
  // Predicated region
  $region18: #{mlp_net_forward.1} parent=0 // pred_check
    _
  $region19: #{mlp_net_forward.1} parent=0 // pred_check_branch
    %715 = sbr.rel (0) target = $region21
  $region20: #{mlp_net_forward.1} parent=0 // pred_region
    _
  $region21: #{mlp_net_forward.1} parent=0 // pred_fallthru
    _

</llo_original>
